<compile_context>
chip_gen: v5e
topology: v5e:2x2
jax: 0.10.0
libtpu: 0.0.40
codegen_flags: <defaults>
</compile_context>

<pallas_src>
import jax
import jax.numpy as jnp
from jax.experimental import pallas as pl
from jax.experimental.pallas import tpu as pltpu


def mean_pool_kernel(x_ref, mask_ref, o_ref, msum_ref):
    # x_ref:    (TB, TS, H) block of last_hidden_state
    # mask_ref: (TB, TS, 1) block of attention_mask (hidden dtype or f32)
    # o_ref:    (TB, H)     f32 output block; same block across the S grid axis,
    #                       so it stays resident in VMEM and doubles as the acc.
    # msum_ref: (TB, 1)     f32 scratch mask-count accumulator
    s = pl.program_id(1)

    @pl.when(s == 0)
    def _():
        o_ref[...] = jnp.zeros_like(o_ref)
        msum_ref[...] = jnp.zeros_like(msum_ref)

    x = x_ref[...]                                    # (TB, TS, H)
    m = mask_ref[...]                                 # (TB, TS, 1)

    # 0/1 mask multiply is exact in the input dtype; accumulate in f32.
    o_ref[...] += jnp.sum(x * m, axis=1, dtype=jnp.float32)     # (TB, H)
    msum_ref[...] += jnp.sum(m, axis=1, dtype=jnp.float32)      # (TB, 1)

    @pl.when(s == pl.num_programs(1) - 1)
    def _():
        denom = jnp.maximum(msum_ref[...], 1e-9)                # (TB, 1)
        o_ref[...] *= pl.reciprocal(denom, approx=False)


def _round_up(x, m):
    return ((x + m - 1) // m) * m


def _vmem_budgets():
    """Generation-aware (per-step block budget, vmem_limit) in bytes."""
    try:
        vmem_cap = int(getattr(pltpu.get_tpu_info(), "vmem_capacity_bytes",
                               64 * 1024 * 1024))
    except Exception:
        vmem_cap = 64 * 1024 * 1024  # conservative (v7x-class) fallback
    if vmem_cap <= 64 * 1024 * 1024:
        # v7x-class: 64 MiB physical VMEM, ~3.2 TB/s HBM.
        block_budget = 12 * 1024 * 1024
        vmem_limit = 48 * 1024 * 1024
    else:
        # v5e / v6e: 128 MiB physical VMEM.
        block_budget = 16 * 1024 * 1024
        vmem_limit = 64 * 1024 * 1024
    vmem_limit = min(vmem_limit, (vmem_cap * 3) // 4)
    return block_budget, vmem_limit


def mean_pooling(last_hidden_state, attention_mask):
    """Pallas TPU implementation of MeanPooling.forward.

    Args:
      last_hidden_state: [B, S, H] float array (f32 or bf16).
      attention_mask:    [B, S] int / bool / float array.
    Returns:
      [B, H] float32 mean-pooled embeddings.
    """
    B, S, H = last_hidden_state.shape
    assert attention_mask.shape == (B, S)

    x = last_hidden_state
    x_itemsize = jnp.dtype(x.dtype).itemsize

    # Cast 0/1 int/bool masks to the hidden dtype (exact, halves the padded
    # footprint for bf16); keep float masks in f32 so non-binary (soft) masks
    # match the f32 reference exactly.
    if jnp.issubdtype(attention_mask.dtype, jnp.floating):
        mask_dtype = jnp.float32
    else:
        mask_dtype = x.dtype
    mask_itemsize = jnp.dtype(mask_dtype).itemsize

    # Batch tile: 8 rows -> sublane-dense output; keeps the "parallel" grid
    # axis >= 2 steps (both v7x TensorCores busy) whenever B_pad >= 16.
    TB = 8

    # Sequence tile: bound by a per-step byte budget covering the x block plus
    # the mask block's 1 -> 128 lane padding. Grow TS, not TB, for longer
    # contiguous HBM runs per DMA segment. No artificial TS cap.
    block_budget, vmem_limit = _vmem_budgets()
    bytes_per_seq_step = TB * (H * x_itemsize + 128 * mask_itemsize)
    max_ts = max(8, block_budget // max(bytes_per_seq_step, 1))

    if S <= max_ts:
        TS = _round_up(S, 8)
    else:
        TS = (max_ts // 8) * 8

    # Pad with zero-mask rows instead of falling back to full-dim blocks:
    # padded rows contribute 0 to both sums; the 1e-9 clamp handles them.
    B_pad = _round_up(B, TB)
    S_pad = _round_up(S, TS)
    if B_pad != B or S_pad != S:
        x = jnp.pad(x, ((0, B_pad - B), (0, S_pad - S), (0, 0)))
        attention_mask = jnp.pad(attention_mask,
                                 ((0, B_pad - B), (0, S_pad - S)))

    # Mask as [B, S, 1]: S on sublanes, broadcast over H is a free lane-bcast.
    mask3 = attention_mask.astype(mask_dtype).reshape(B_pad, S_pad, 1)

    grid = (B_pad // TB, S_pad // TS)

    out = pl.pallas_call(
        mean_pool_kernel,
        out_shape=jax.ShapeDtypeStruct((B_pad, H), jnp.float32),
        grid_spec=pltpu.PrefetchScalarGridSpec(
            num_scalar_prefetch=0,
            grid=grid,
            in_specs=[
                pl.BlockSpec((TB, TS, H), lambda b, s: (b, s, 0)),
                pl.BlockSpec((TB, TS, 1), lambda b, s: (b, s, 0)),
            ],
            # Same output block across the S (reduction) axis -> resident acc.
            out_specs=pl.BlockSpec((TB, H), lambda b, s: (b, 0)),
            scratch_shapes=[
                pltpu.VMEM((TB, 1), jnp.float32),
            ],
        ),
        compiler_params=pltpu.CompilerParams(
            dimension_semantics=("parallel", "arbitrary"),
            vmem_limit_bytes=int(vmem_limit),
        ),
    )(x, mask3)

    if B_pad != B:
        out = out[:B]
    return out


def mean_pooling_ref(last_hidden_state, attention_mask):
    # Pure-JAX reference matching the PyTorch semantics exactly.
    m = attention_mask[..., None].astype(jnp.float32)
    sum_emb = jnp.sum(last_hidden_state.astype(jnp.float32) * m, axis=1)
    sum_mask = jnp.maximum(jnp.sum(m, axis=1), 1e-9)
    return sum_emb / sum_mask


if __name__ == "__main__":
    key = jax.random.PRNGKey(0)
    k_x, k_m, k_x2, k_m2 = jax.random.split(key, 4)

    # Case 1: nominal small shapes, f32 hidden, int32 HF-style mask.
    B, S, H = 2, 8, 32
    last_hidden_state = jax.random.normal(k_x, (B, S, H), dtype=jnp.float32)
    attention_mask = (jax.random.uniform(k_m, (B, S)) > 0.3).astype(jnp.int32)

    out = mean_pooling(last_hidden_state, attention_mask)
    out = jax.block_until_ready(out)
    expected = mean_pooling_ref(last_hidden_state, attention_mask)
    assert out.shape == (B, H)
    assert jnp.allclose(out, expected, atol=1e-5, rtol=1e-5)

    # Case 2: awkward (padding) shapes, bf16 hidden, one all-zero mask row.
    B2, S2, H2 = 3, 13, 32
    x2 = jax.random.normal(k_x2, (B2, S2, H2), dtype=jnp.bfloat16)
    m2 = (jax.random.uniform(k_m2, (B2, S2)) > 0.3).astype(jnp.int32)
    m2 = m2.at[0].set(0)  # exercise the clamp(1e-9) path

    out2 = mean_pooling(x2, m2)
    out2 = jax.block_until_ready(out2)
    expected2 = mean_pooling_ref(x2, m2)
    assert out2.shape == (B2, H2)
    assert jnp.allclose(out2, expected2, atol=1e-5, rtol=1e-5)

    print("KERNEL_OK")
</pallas_src>

<mosaic_0001>
module attributes {stable_mosaic.version = 11 : i64} {
  func.func @mean_pool_kernel(%arg0: i32, %arg1: i32, %arg2: memref<8x8x32xf32, #tpu.memory_space<vmem>>, %arg3: memref<8x8x1xf32, #tpu.memory_space<vmem>>, %arg4: memref<8x32xf32, #tpu.memory_space<vmem>>, %arg5: memref<8x1xf32, #tpu.memory_space<vmem>>) attributes {dimension_semantics = [#tpu.dimension_semantics<parallel>, #tpu.dimension_semantics<arbitrary>], iteration_bounds = array<i64: 1, 1>, scalar_prefetch = 0 : i64, scratch_operands = 1 : i64, tpu.core_type = #tpu.core_type<tc>, window_params = [{transform_indices = @transform_0, window_bounds = array<i64: 8, 8, 32>}, {transform_indices = @transform_1, window_bounds = array<i64: 8, 8, 1>}, {transform_indices = @transform_2, window_bounds = array<i64: 8, 32>}]} {
    %c0_i32 = arith.constant 0 : i32
    %0 = arith.cmpi eq, %arg1, %c0_i32 : i32
    %1 = arith.extui %0 : i1 to i32
    %c0_i32_0 = arith.constant 0 : i32
    %2 = arith.cmpi ne, %1, %c0_i32_0 : i32
    scf.if %2 {
      %cst_17 = arith.constant 0.000000e+00 : f32
      %18 = vector.broadcast %cst_17 : f32 to vector<8x32xf32>
      %c0_18 = arith.constant 0 : index
      %c0_19 = arith.constant 0 : index
      %19 = vector.load %arg4[%c0_18, %c0_19] : memref<8x32xf32, #tpu.memory_space<vmem>>, vector<8x32xf32>
      tpu.vector_store %arg4[%c0_18, %c0_19], %18 {strides = array<i32>} : memref<8x32xf32, #tpu.memory_space<vmem>>, vector<8x32xf32>,
      %cst_20 = arith.constant 0.000000e+00 : f32
      %20 = vector.broadcast %cst_20 : f32 to vector<8x1xf32>
      %c0_21 = arith.constant 0 : index
      %c0_22 = arith.constant 0 : index
      %21 = vector.load %arg5[%c0_21, %c0_22] : memref<8x1xf32, #tpu.memory_space<vmem>>, vector<8x1xf32>
      tpu.vector_store %arg5[%c0_21, %c0_22], %20 {strides = array<i32>} : memref<8x1xf32, #tpu.memory_space<vmem>>, vector<8x1xf32>,
    } else {
    }
    %c0 = arith.constant 0 : index
    %c0_1 = arith.constant 0 : index
    %c0_2 = arith.constant 0 : index
    %3 = vector.load %arg2[%c0, %c0_1, %c0_2] : memref<8x8x32xf32, #tpu.memory_space<vmem>>, vector<8x8x32xf32>
    %c0_3 = arith.constant 0 : index
    %c0_4 = arith.constant 0 : index
    %c0_5 = arith.constant 0 : index
    %4 = vector.load %arg3[%c0_3, %c0_4, %c0_5] : memref<8x8x1xf32, #tpu.memory_space<vmem>>, vector<8x8x1xf32>
    %c0_6 = arith.constant 0 : index
    %c0_7 = arith.constant 0 : index
    %5 = vector.load %arg4[%c0_6, %c0_7] : memref<8x32xf32, #tpu.memory_space<vmem>>, vector<8x32xf32>
    %6 = vector.broadcast %4 : vector<8x8x1xf32> to vector<8x8x32xf32>
    %7 = arith.mulf %3, %6 : vector<8x8x32xf32>
    %cst = arith.constant dense<0.000000e+00> : vector<8x32xf32>
    %8 = vector.multi_reduction <add>, %7, %cst [1] : vector<8x8x32xf32> to vector<8x32xf32>
    %9 = arith.addf %5, %8 : vector<8x32xf32>
    %c0_8 = arith.constant 0 : index
    %c0_9 = arith.constant 0 : index
    %10 = vector.load %arg4[%c0_8, %c0_9] : memref<8x32xf32, #tpu.memory_space<vmem>>, vector<8x32xf32>
    tpu.vector_store %arg4[%c0_8, %c0_9], %9 {strides = array<i32>} : memref<8x32xf32, #tpu.memory_space<vmem>>, vector<8x32xf32>,
    %c0_10 = arith.constant 0 : index
    %c0_11 = arith.constant 0 : index
    %11 = vector.load %arg5[%c0_10, %c0_11] : memref<8x1xf32, #tpu.memory_space<vmem>>, vector<8x1xf32>
    %cst_12 = arith.constant dense<0.000000e+00> : vector<8x1xf32>
    %12 = vector.multi_reduction <add>, %4, %cst_12 [1] : vector<8x8x1xf32> to vector<8x1xf32>
    %13 = arith.addf %11, %12 : vector<8x1xf32>
    %c0_13 = arith.constant 0 : index
    %c0_14 = arith.constant 0 : index
    %14 = vector.load %arg5[%c0_13, %c0_14] : memref<8x1xf32, #tpu.memory_space<vmem>>, vector<8x1xf32>
    tpu.vector_store %arg5[%c0_13, %c0_14], %13 {strides = array<i32>} : memref<8x1xf32, #tpu.memory_space<vmem>>, vector<8x1xf32>,
    %c0_i32_15 = arith.constant 0 : i32
    %15 = arith.cmpi eq, %arg1, %c0_i32_15 : i32
    %16 = arith.extui %15 : i1 to i32
    %c0_i32_16 = arith.constant 0 : i32
    %17 = arith.cmpi ne, %16, %c0_i32_16 : i32
    scf.if %17 {
      %c0_17 = arith.constant 0 : index
      %c0_18 = arith.constant 0 : index
      %18 = vector.load %arg5[%c0_17, %c0_18] : memref<8x1xf32, #tpu.memory_space<vmem>>, vector<8x1xf32>
      %cst_19 = arith.constant 9.99999971E-10 : f32
      %19 = vector.broadcast %cst_19 : f32 to vector<8x1xf32>
      %20 = arith.maximumf %18, %19 : vector<8x1xf32>
      %c0_20 = arith.constant 0 : index
      %c0_21 = arith.constant 0 : index
      %21 = vector.load %arg4[%c0_20, %c0_21] : memref<8x32xf32, #tpu.memory_space<vmem>>, vector<8x32xf32>
      %22 = tpu.reciprocal %20 : vector<8x1xf32> -> vector<8x1xf32>
      %23 = vector.broadcast %22 : vector<8x1xf32> to vector<8x32xf32>
      %24 = arith.mulf %21, %23 : vector<8x32xf32>
      %c0_22 = arith.constant 0 : index
      %c0_23 = arith.constant 0 : index
      %25 = vector.load %arg4[%c0_22, %c0_23] : memref<8x32xf32, #tpu.memory_space<vmem>>, vector<8x32xf32>
      tpu.vector_store %arg4[%c0_22, %c0_23], %24 {strides = array<i32>} : memref<8x32xf32, #tpu.memory_space<vmem>>, vector<8x32xf32>,
    } else {
    }
    return
  }
  func.func @transform_0(%arg0: i32, %arg1: i32) -> (i32, i32, i32) {
    %c0_i32 = arith.constant 0 : i32
    %c0_i32_0 = arith.constant 0 : i32
    return %arg0, %arg1, %c0_i32 : i32, i32, i32
  }
  func.func @transform_1(%arg0: i32, %arg1: i32) -> (i32, i32, i32) {
    %c0_i32 = arith.constant 0 : i32
    %c0_i32_0 = arith.constant 0 : i32
    return %arg0, %arg1, %c0_i32 : i32, i32, i32
  }
  func.func @transform_2(%arg0: i32, %arg1: i32) -> (i32, i32) {
    %c0_i32 = arith.constant 0 : i32
    %c0_i32_0 = arith.constant 0 : i32
    return %arg0, %c0_i32 : i32, i32
  }
}

</mosaic_0001>

<llo_original>
// kernel: tpu_custom_call.1
$region0: #{tpu_custom_call.1}
  #allocation0 [shape = 'u32[]', space=smem, size = 0x4, offset = 0x4, fixed_abs, tag = 'smem constant byte address 0x4 - core index']
  #allocation1 [shape = 'u32[72,128]{1,0:T(1,128)}', space=vmem, size = 0x9000, scoped, tag = 'internal scratch']
  #allocation2 [shape = 'f32[8,1]{1,0:T(8,128)}', space=vmem, size = 0x1000, scoped, tag = 'scratch operand']
  %s0 = inlined_call_operand.vmem [shape: f32[8,8,32], index: 0, kind: input, shape index: {}]
  %s1 = inlined_call_operand.vmem [shape: f32[8,8,1], index: 1, kind: input, shape index: {}]
  %s2 = inlined_call_operand.hbm [shape: f32[8,32], index: 2, kind: output, shape index: {}]
  %s3 = sld [smem:[#allocation0]]
  $region26: #{tpu_custom_call.1} parent=0
    _
  %s5 = ssub.s32 1, %s3
  %s6 = scalar_select 0, %s5, %s3
  $region1: #{tpu_custom_call.1} parent=0
    #allocation3 [shape = 'u8[4096]{0}', space=vmem, size = 0x1000, scoped, tag = 'output window, operand 0, single buffered']
    #allocation4 [shape = 's32[1]{0}', space=sflag, size = 0x4, scoped, tag = 'scoped memory for tpu_custom_call.1']
    %7 = vsyncpa [#allocation4], 0
    // Predicated region
    $region2: #{tpu_custom_call.1} parent=1 // pred_check
      _
    $region3: #{tpu_custom_call.1} parent=1 // pred_check_branch
      %9 = sbr.rel (0) target = $region5
    $region4: #{tpu_custom_call.1} parent=1 // pred_region
      _
    $region5: #{tpu_custom_call.1} parent=1 // pred_fallthru
      _
    // Predicated region
    $region6: #{tpu_custom_call.1} parent=1 // pred_check
      _
    $region7: #{tpu_custom_call.1} parent=1 // pred_check_branch
      %11 = sbr.rel (0) target = $region9
    $region8: #{tpu_custom_call.1} parent=1 // pred_region
      _
    $region9: #{tpu_custom_call.1} parent=1 // pred_fallthru
      _
    %p12 = scmp.eq.s32.totalorder 0, 0
    // Predicated region
    $region10: #{tpu_custom_call.1} parent=1 // pred_check
      %p13 = pneg %p12
    $region11: #{tpu_custom_call.1} parent=1 // pred_check_branch
      %15 = sbr.rel (%p13) target = $region13
    $region12: #{tpu_custom_call.1} parent=1 // pred_region
      %vm16 = vcmask 261120
      %17 = vst.msk [vmem:[#allocation3] sm:$0xff] %vm16, 0.0
      %vm18 = vcmask 7168
      %19 = vst.msk [vmem:[#allocation2] sm:$0xff] %vm18, 0.0
    $region13: #{tpu_custom_call.1} parent=1 // pred_fallthru
      _
    %v20 = vld [vmem:[%s0] sm:$0xff]
    %v21 = vld [vmem:[%s0 + $0x8] sm:$0xff]
    %v22 = vld [vmem:[%s0 + $0x10] sm:$0xff]
    %v23 = vld [vmem:[%s0 + $0x18] sm:$0xff]
    %v24 = vld [vmem:[%s0 + $0x20] sm:$0xff]
    %v25 = vld [vmem:[%s0 + $0x28] sm:$0xff]
    %v26 = vld [vmem:[%s0 + $0x30] sm:$0xff]
    %v27 = vld [vmem:[%s0 + $0x38] sm:$0xff]
    %v28 = vld [vmem:[%s1] sm:$0xff]
    %v29 = vld [vmem:[%s1 + $0x8] sm:$0xff]
    %v30 = vld [vmem:[%s1 + $0x10] sm:$0xff]
    %v31 = vld [vmem:[%s1 + $0x18] sm:$0xff]
    %v32 = vld [vmem:[%s1 + $0x20] sm:$0xff]
    %v33 = vld [vmem:[%s1 + $0x28] sm:$0xff]
    %v34 = vld [vmem:[%s1 + $0x30] sm:$0xff]
    %v35 = vld [vmem:[%s1 + $0x38] sm:$0xff]
    %v36 = vld [vmem:[#allocation3] sm:$0xff]
    %38 = vset.pattern.permute.xlu0 0
    %39 = vperm.xlu0 %38, %v28
    %v40 = vpop.permute.xlu0 %39
    %43 = vset.pattern.permute.xlu0 0
    %44 = vperm.xlu0 %43, %v29
    %v45 = vpop.permute.xlu0 %44
    %48 = vset.pattern.permute.xlu0 0
    %49 = vperm.xlu0 %48, %v30
    %v50 = vpop.permute.xlu0 %49
    %53 = vset.pattern.permute.xlu0 0
    %54 = vperm.xlu0 %53, %v31
    %v55 = vpop.permute.xlu0 %54
    %58 = vset.pattern.permute.xlu0 0
    %59 = vperm.xlu0 %58, %v32
    %v60 = vpop.permute.xlu0 %59
    %63 = vset.pattern.permute.xlu0 0
    %64 = vperm.xlu0 %63, %v33
    %v65 = vpop.permute.xlu0 %64
    %68 = vset.pattern.permute.xlu0 0
    %69 = vperm.xlu0 %68, %v34
    %v70 = vpop.permute.xlu0 %69
    %73 = vset.pattern.permute.xlu0 0
    %74 = vperm.xlu0 %73, %v35
    %v75 = vpop.permute.xlu0 %74
    %v77 = vmul.f32 %v20, %v40
    %v78 = vmul.f32 %v21, %v45
    %v79 = vmul.f32 %v22, %v50
    %v80 = vmul.f32 %v23, %v55
    %v81 = vmul.f32 %v24, %v60
    %v82 = vmul.f32 %v25, %v65
    %v83 = vmul.f32 %v26, %v70
    %v84 = vmul.f32 %v27, %v75
    %vm85 = vcmask 261120
    %v86 = vsel %vm85, %v77, 0.0
    %v87 = vrot.slane %v86, 4
    %v88 = vadd.f32 %v86, %v87
    %v89 = vrot.slane %v88, 2
    %v90 = vadd.f32 %v88, %v89
    %v91 = vrot.slane %v90, 1
    %v92 = vadd.f32 %v90, %v91
    %v93 = vsel %vm85, %v78, 0.0
    %v94 = vrot.slane %v93, 4
    %v95 = vadd.f32 %v93, %v94
    %v96 = vrot.slane %v95, 2
    %v97 = vadd.f32 %v95, %v96
    %v98 = vrot.slane %v97, 1
    %v99 = vadd.f32 %v97, %v98
    %v100 = vsel %vm85, %v79, 0.0
    %v101 = vrot.slane %v100, 4
    %v102 = vadd.f32 %v100, %v101
    %v103 = vrot.slane %v102, 2
    %v104 = vadd.f32 %v102, %v103
    %v105 = vrot.slane %v104, 1
    %v106 = vadd.f32 %v104, %v105
    %v107 = vsel %vm85, %v80, 0.0
    %v108 = vrot.slane %v107, 4
    %v109 = vadd.f32 %v107, %v108
    %v110 = vrot.slane %v109, 2
    %v111 = vadd.f32 %v109, %v110
    %v112 = vrot.slane %v111, 1
    %v113 = vadd.f32 %v111, %v112
    %v114 = vsel %vm85, %v81, 0.0
    %v115 = vrot.slane %v114, 4
    %v116 = vadd.f32 %v114, %v115
    %v117 = vrot.slane %v116, 2
    %v118 = vadd.f32 %v116, %v117
    %v119 = vrot.slane %v118, 1
    %v120 = vadd.f32 %v118, %v119
    %v121 = vsel %vm85, %v82, 0.0
    %v122 = vrot.slane %v121, 4
    %v123 = vadd.f32 %v121, %v122
    %v124 = vrot.slane %v123, 2
    %v125 = vadd.f32 %v123, %v124
    %v126 = vrot.slane %v125, 1
    %v127 = vadd.f32 %v125, %v126
    %v128 = vsel %vm85, %v83, 0.0
    %v129 = vrot.slane %v128, 4
    %v130 = vadd.f32 %v128, %v129
    %v131 = vrot.slane %v130, 2
    %v132 = vadd.f32 %v130, %v131
    %v133 = vrot.slane %v132, 1
    %v134 = vadd.f32 %v132, %v133
    %v135 = vsel %vm85, %v84, 0.0
    %v136 = vrot.slane %v135, 4
    %v137 = vadd.f32 %v135, %v136
    %v138 = vrot.slane %v137, 2
    %v139 = vadd.f32 %v137, %v138
    %v140 = vrot.slane %v139, 1
    %v141 = vadd.f32 %v139, %v140
    %vm150 = vcmask 1041409
    %v151 = vsel %vm150, %v99, %v92
    %vm152 = vcmask 1042434
    %v153 = vsel %vm152, %v106, %v151
    %vm154 = vcmask 1043459
    %v155 = vsel %vm154, %v113, %v153
    %vm156 = vcmask 1044484
    %v157 = vsel %vm156, %v120, %v155
    %vm158 = vcmask 1045509
    %v159 = vsel %vm158, %v127, %v157
    %vm160 = vcmask 1046534
    %v161 = vsel %vm160, %v134, %v159
    %vm162 = vcmask 1047559
    %v163 = vsel %vm162, %v141, %v161
    %v165 = vadd.f32 %v36, %v163
    %166 = vst.msk [vmem:[#allocation3] sm:$0xff] %vm85, %v165
    %v167 = vld [vmem:[#allocation2] sm:$0xff]
    %vm168 = vcmask 7168
    %v169 = vsel %vm168, %v28, 0.0
    %v170 = vrot.slane %v169, 4
    %v171 = vadd.f32 %v169, %v170
    %v172 = vrot.slane %v171, 2
    %v173 = vadd.f32 %v171, %v172
    %v174 = vrot.slane %v173, 1
    %v175 = vadd.f32 %v173, %v174
    %v176 = vsel %vm168, %v29, 0.0
    %v177 = vrot.slane %v176, 4
    %v178 = vadd.f32 %v176, %v177
    %v179 = vrot.slane %v178, 2
    %v180 = vadd.f32 %v178, %v179
    %v181 = vrot.slane %v180, 1
    %v182 = vadd.f32 %v180, %v181
    %v183 = vsel %vm168, %v30, 0.0
    %v184 = vrot.slane %v183, 4
    %v185 = vadd.f32 %v183, %v184
    %v186 = vrot.slane %v185, 2
    %v187 = vadd.f32 %v185, %v186
    %v188 = vrot.slane %v187, 1
    %v189 = vadd.f32 %v187, %v188
    %v190 = vsel %vm168, %v31, 0.0
    %v191 = vrot.slane %v190, 4
    %v192 = vadd.f32 %v190, %v191
    %v193 = vrot.slane %v192, 2
    %v194 = vadd.f32 %v192, %v193
    %v195 = vrot.slane %v194, 1
    %v196 = vadd.f32 %v194, %v195
    %v197 = vsel %vm168, %v32, 0.0
    %v198 = vrot.slane %v197, 4
    %v199 = vadd.f32 %v197, %v198
    %v200 = vrot.slane %v199, 2
    %v201 = vadd.f32 %v199, %v200
    %v202 = vrot.slane %v201, 1
    %v203 = vadd.f32 %v201, %v202
    %v204 = vsel %vm168, %v33, 0.0
    %v205 = vrot.slane %v204, 4
    %v206 = vadd.f32 %v204, %v205
    %v207 = vrot.slane %v206, 2
    %v208 = vadd.f32 %v206, %v207
    %v209 = vrot.slane %v208, 1
    %v210 = vadd.f32 %v208, %v209
    %v211 = vsel %vm168, %v34, 0.0
    %v212 = vrot.slane %v211, 4
    %v213 = vadd.f32 %v211, %v212
    %v214 = vrot.slane %v213, 2
    %v215 = vadd.f32 %v213, %v214
    %v216 = vrot.slane %v215, 1
    %v217 = vadd.f32 %v215, %v216
    %v218 = vsel %vm168, %v35, 0.0
    %v219 = vrot.slane %v218, 4
    %v220 = vadd.f32 %v218, %v219
    %v221 = vrot.slane %v220, 2
    %v222 = vadd.f32 %v220, %v221
    %v223 = vrot.slane %v222, 1
    %v224 = vadd.f32 %v222, %v223
    %v233 = vsel %vm150, %v182, %v175
    %v234 = vsel %vm152, %v189, %v233
    %v235 = vsel %vm154, %v196, %v234
    %v236 = vsel %vm156, %v203, %v235
    %v237 = vsel %vm158, %v210, %v236
    %v238 = vsel %vm160, %v217, %v237
    %v239 = vsel %vm162, %v224, %v238
    %v241 = vadd.f32 %v167, %v239
    %242 = vst.msk [vmem:[#allocation2] sm:$0xff] %vm168, %v241
    // Predicated region
    $region14: #{tpu_custom_call.1} parent=1 // pred_check
      %p243 = pneg %p12
    $region15: #{tpu_custom_call.1} parent=1 // pred_check_branch
      %245 = sbr.rel (%p243) target = $region17
    $region16: #{tpu_custom_call.1} parent=1 // pred_region
      %v246 = vld [vmem:[#allocation2] sm:$0xff]
      %v247 = vmax.f32 %v246, 1e-09
      %v248 = vld [vmem:[#allocation3] sm:$0xff]
      %v249 = vrcp.pop %v247
      %v250 = vmul.f32 %v247, %v249
      %v251 = vsub.f32 1.0, %v250
      %v252 = vmul.f32 %v249, %v251
      %v253 = vadd.f32 %v249, %v252
      %vm254 = vweird.f32 %v247
      %vm255 = vweird.f32 %v249
      %vm256 = vmor %vm254, %vm255
      %v257 = vsel %vm256, %v249, %v253
      %v258 = vand.u32 2147483647, %v247
      %vm259 = vcmp.eq.f32.partialorder %v258, 8.507059e+37
      %v260 = vand.u32 %v247, 2147483648
      %v261 = vor.u32 1.1754944e-38, %v260
      %v262 = vsel %vm259, %v261, %v257
      %264 = vset.pattern.permute.xlu0 0
      %265 = vperm.xlu0 %264, %v262
      %v266 = vpop.permute.xlu0 %265
      %v268 = vmul.f32 %v248, %v266
      %269 = vst.msk [vmem:[#allocation3] sm:$0xff] %vm85, %v268
    $region17: #{tpu_custom_call.1} parent=1 // pred_fallthru
      _
    // Predicated region
    $region18: #{tpu_custom_call.1} parent=1 // pred_check
      _
    $region19: #{tpu_custom_call.1} parent=1 // pred_check_branch
      %271 = sbr.rel (0) target = $region21
    $region20: #{tpu_custom_call.1} parent=1 // pred_region
      %273 = vsyncadd [#allocation4], 0
      %s275 = sshll.u32 [#allocation3], 4
      %s276 = int_to_ptr.vmem [resolvable:$true] %s275
      %s277 = sshll.u32 %s2, 4
      %s278 = int_to_ptr.hbm [resolvable:$true] %s277
      %280 = dma.vmem_to_hbm [thread:$0]  %s276, 128, %s278, [#allocation4]
    $region21: #{tpu_custom_call.1} parent=1 // pred_fallthru
      _
    // Predicated region
    $region22: #{tpu_custom_call.1} parent=1 // pred_check
      _
    $region23: #{tpu_custom_call.1} parent=1 // pred_check_branch
      %282 = sbr.rel (0) target = $region25
    $region24: #{tpu_custom_call.1} parent=1 // pred_region
      %284 = dma.done [#allocation4], 128
    $region25: #{tpu_custom_call.1} parent=1 // pred_fallthru
      _
    %285 = vsyncpa [#allocation4], 1

</llo_original>
